<compile_context>
chip_gen: v7x
topology: tpu7x:2x2x1
jax: 0.10.0
libtpu: 0.0.40
codegen_flags: <defaults>
</compile_context>

<pallas_src>
import functools

import jax
import jax.numpy as jnp
from jax import lax
from jax.experimental import pallas as pl
from jax.experimental.pallas import tpu as pltpu


# ---------------------------------------------------------------------------
# Pallas kernel: fused (W @ patches^T + b) -> spline / silu -> spline + w2*silu
#   (w1 is pre-folded into the spline weights in the wrapper)
# ---------------------------------------------------------------------------
def _spline_conv_kernel(knots_ref,   # SMEM (num_knots,) f32
                        p_ref,       # VMEM (1, TILE_K, TILE_M) bf16   patches^T tile
                        w_ref,       # VMEM (C_OUT_PAD, TILE_K) bf16   conv weight tile
                        const_ref,   # VMEM (C_OUT_PAD, num_knots+2) f32 [spline_w*w1 | bias | w2]
                        o_ref,       # VMEM (1, C_OUT_PAD, TILE_M) f32
                        acc_ref,     # VMEM (C_OUT_PAD, TILE_M) f32   scratch accumulator
                        *, ew_dtype):
    num_knots = const_ref.shape[1] - 2
    k = pl.program_id(2)

    @pl.when(k == 0)
    def _init():
        acc_ref[...] = jnp.zeros_like(acc_ref)

    # Conv3d expressed as an MXU matmul over this K slice of the im2col patches
    # (bf16 operands, f32 accumulation across the K grid axis).
    acc_ref[...] += jnp.dot(w_ref[...], p_ref[0], preferred_element_type=jnp.float32)

    @pl.when(k == pl.num_programs(2) - 1)
    def _finalize():
        const = const_ref[...]                                   # one load; slice in registers
        conv = acc_ref[...] + const[:, num_knots:num_knots + 1]  # + bias (sublane broadcast)

        # SiLU via a single EUP tanh push: x*sigmoid(x) = 0.5*x*(1 + tanh(x/2)).
        silu = 0.5 * conv * (1.0 + jnp.tanh(0.5 * conv))

        # BSpline3D: sum_k relu(conv - knot_k)^3 * (spline_w * w1)[c, k]
        # Lane-dense VALU loop; bf16 on v6e/v7x halves VALU issue, f32 on v5e.
        # The running sum stays f32 so the cubic's rounding amplification is bounded.
        cw = conv.astype(ew_dtype)
        sw = const[:, :num_knots].astype(ew_dtype)
        spline = jnp.zeros(conv.shape, jnp.float32)
        for j in range(num_knots):                               # small static unroll (10)
            t = jnp.maximum(cw - knots_ref[j].astype(ew_dtype), 0.0)   # scalar knot from SMEM
            spline = spline + (t * t * t) * sw[:, j:j + 1]

        w2 = const[:, num_knots + 1:num_knots + 2]
        o_ref[0] = (spline + w2 * silu).astype(o_ref.dtype)


# ---------------------------------------------------------------------------
# Tiling helpers
# ---------------------------------------------------------------------------
def _round_up(v, m):
    return (v + m - 1) // m * m


def _default_elementwise_dtype():
    """bf16 elementwise on chips with a bf16 VPU/EUP (v6e/v7x); f32 otherwise (v5e, ...)."""
    try:
        kind = jax.devices()[0].device_kind.lower()
    except Exception:
        return jnp.float32
    if "v6" in kind or "v7" in kind or "7x" in kind:
        return jnp.bfloat16
    return jnp.float32


def _pick_tile_m(mb, tile_k, c_out_pad, n_batch, want=2048, vmem_budget=12 << 20):
    """Largest multiple-of-128 tile_m whose (double-buffered) blocks fit the VMEM budget.

    The budget (12 MiB) stays under every generation's default scoped VMEM limit
    (v5e 16 MiB, v6e/v7x 32 MiB), so no vmem_limit_bytes override is needed.
    """
    mb128 = _round_up(mb, 128)

    def block_bytes(tm):
        return (2 * tile_k * tm * 2            # patches^T tile, bf16, double-buffered
                + 2 * c_out_pad * tm * 4       # output tile, f32, double-buffered
                + c_out_pad * tm * 4           # f32 accumulator scratch
                + 2 * c_out_pad * tile_k * 2)  # conv-weight tile, bf16

    cap = max(128, min(want, mb128))
    while cap > 128 and block_bytes(cap) > vmem_budget:
        cap -= 128
    # v7x has 2 TensorCores: keep >=2 grid steps along a 'parallel' axis when N == 1.
    if n_batch == 1 and mb128 >= 256:
        cap = min(cap, max(128, (mb128 // 2) // 128 * 128))
    # Prefer a tile that divides Mb exactly so the post-kernel pad slice is a no-op.
    if mb % 128 == 0:
        for tm in range(cap, 127, -128):
            if mb % tm == 0:
                return tm
    return cap


# ---------------------------------------------------------------------------
# Wrapper: im2col glue + pallas_call
# ---------------------------------------------------------------------------
def spline_conv3d_forward(x, params, *, kernel_size=3, stride=1, padding=1,
                          tile_m=None, tile_k_cap=1024, elementwise_dtype=None):
    """x: (N, C_in, D, H, W) float32.  Returns (N, C_out, Do, Ho, Wo) float32."""
    weight = params["conv_weight"]       # (C_out, C_in, k, k, k)
    bias = params["conv_bias"]           # (C_out,)
    knots = params["knots"]              # (num_knots,)
    spline_w = params["spline_weights"]  # (C_out, num_knots)
    w1 = params["w1"]                    # (C_out,)
    w2 = params["w2"]                    # (C_out,)

    N, C_in, D, H, W = x.shape
    C_out = weight.shape[0]
    ks = kernel_size
    num_knots = knots.shape[0]

    Do = (D + 2 * padding - ks) // stride + 1
    Ho = (H + 2 * padding - ks) // stride + 1
    Wo = (W + 2 * padding - ks) // stride + 1
    Mb = Do * Ho * Wo                    # spatial positions per batch element

    # --- im2col into (N, Kdim, Mb), built directly in bf16 (halves the HBM traffic of the
    #     materialized patches vs building in f32 and casting afterwards). ---
    xpad = jnp.pad(x.astype(jnp.bfloat16),
                   ((0, 0), (0, 0),
                    (padding, padding), (padding, padding), (padding, padding)))
    windows = []
    for kd in range(ks):
        for kh in range(ks):
            for kw in range(ks):
                windows.append(
                    xpad[:, :,
                         kd:kd + stride * Do:stride,
                         kh:kh + stride * Ho:stride,
                         kw:kw + stride * Wo:stride])
    kdim = C_in * ks ** 3
    patches = jnp.stack(windows, axis=2).reshape(N, kdim, Mb)   # rhs^T per batch element

    # --- tiling: lane axis = flattened spatial M, sublane axis = C_out ---
    c_out_pad = _round_up(C_out, 8)            # no 128-pad: MXU is not the binding slot here
    tile_k = min(_round_up(kdim, 128), tile_k_cap)
    kdim_pad = pl.cdiv(_round_up(kdim, 128), tile_k) * tile_k
    if tile_m is None:
        tile_m = _pick_tile_m(Mb, tile_k, c_out_pad, N)
    tile_m = max(128, _round_up(tile_m, 128))
    mb_pad = pl.cdiv(Mb, tile_m) * tile_m

    patches = jnp.pad(patches, ((0, 0), (0, kdim_pad - kdim), (0, mb_pad - Mb)))

    w_mat = weight.reshape(C_out, kdim)        # (C_in, kd, kh, kw) flattening matches im2col
    w_mat = jnp.pad(w_mat, ((0, c_out_pad - C_out), (0, kdim_pad - kdim)))
    w_mat = w_mat.astype(jnp.bfloat16)

    # Fused per-channel constants: [spline_w * w1 | bias | w2]  (w1 folded away).
    const = jnp.concatenate(
        [(spline_w * w1[:, None]).astype(jnp.float32),
         bias.astype(jnp.float32)[:, None],
         w2.astype(jnp.float32)[:, None]], axis=1)              # (C_out, num_knots+2)
    const = jnp.pad(const, ((0, c_out_pad - C_out), (0, 0)))

    ew_dtype = elementwise_dtype if elementwise_dtype is not None else _default_elementwise_dtype()

    grid = (N, mb_pad // tile_m, kdim_pad // tile_k)
    kernel = functools.partial(_spline_conv_kernel, ew_dtype=ew_dtype)
    out = pl.pallas_call(
        kernel,
        out_shape=jax.ShapeDtypeStruct((N, c_out_pad, mb_pad), jnp.float32),
        grid=grid,
        in_specs=[
            pl.BlockSpec(memory_space=pltpu.MemorySpace.SMEM),                   # knots
            pl.BlockSpec((1, tile_k, tile_m), lambda n, i, k: (n, k, i)),        # patches^T
            pl.BlockSpec((c_out_pad, tile_k), lambda n, i, k: (0, k)),           # conv weight
            pl.BlockSpec((c_out_pad, num_knots + 2), lambda n, i, k: (0, 0)),    # fused consts
        ],
        out_specs=pl.BlockSpec((1, c_out_pad, tile_m), lambda n, i, k: (n, 0, i)),
        scratch_shapes=[pltpu.VMEM((c_out_pad, tile_m), jnp.float32)],
        compiler_params=pltpu.CompilerParams(
            dimension_semantics=("parallel", "parallel", "arbitrary")),
    )(knots.astype(jnp.float32), patches, w_mat, const)

    # tile_m divides Mb and C_out % 8 == 0 in the demo, so this slice is a no-op;
    # otherwise XLA strips the zero padding here.
    out = out[:, :C_out, :Mb].reshape(N, C_out, Do, Ho, Wo)
    return out


# ---------------------------------------------------------------------------
# Pure-JAX reference (mirrors the PyTorch forward exactly, f32 end-to-end)
# ---------------------------------------------------------------------------
def reference_forward(x, params, *, stride=1, padding=1):
    weight = params["conv_weight"]
    bias = params["conv_bias"]
    knots = params["knots"]
    spline_w = params["spline_weights"]
    w1 = params["w1"]
    w2 = params["w2"]

    conv = lax.conv_general_dilated(
        x, weight,
        window_strides=(stride, stride, stride),
        padding=[(padding, padding)] * 3,
        dimension_numbers=("NCDHW", "OIDHW", "NCDHW"),
    ) + bias.reshape(1, -1, 1, 1, 1)

    basis = jnp.maximum(conv[..., None] - knots.reshape(1, 1, 1, 1, 1, -1), 0.0) ** 3
    spline = jnp.einsum("bcdhwk,ck->bcdhw", basis, spline_w)
    silu = conv * jax.nn.sigmoid(conv)
    return w1.reshape(1, -1, 1, 1, 1) * spline + w2.reshape(1, -1, 1, 1, 1) * silu


# ---------------------------------------------------------------------------
# Deterministic parameter init + demo
# ---------------------------------------------------------------------------
def init_params(key, in_channels, out_channels, kernel_size, num_knots=10,
                grid_range=(-1.0, 1.0)):
    k1, k2, k3, k4, k5 = jax.random.split(key, 5)
    # Small scale keeps conv_out within the knot range so the spline is active.
    conv_weight = 0.1 * jax.random.normal(
        k1, (out_channels, in_channels, kernel_size, kernel_size, kernel_size),
        dtype=jnp.float32)
    conv_bias = 0.1 * jax.random.normal(k2, (out_channels,), dtype=jnp.float32)
    knots = jnp.linspace(grid_range[0], grid_range[1], num_knots, dtype=jnp.float32)
    spline_weights = jax.random.normal(k3, (out_channels, num_knots), dtype=jnp.float32)
    w1 = jax.random.normal(k4, (out_channels,), dtype=jnp.float32)
    w2 = jax.random.normal(k5, (out_channels,), dtype=jnp.float32)
    return dict(conv_weight=conv_weight, conv_bias=conv_bias, knots=knots,
                spline_weights=spline_weights, w1=w1, w2=w2)


if __name__ == "__main__":
    key = jax.random.PRNGKey(0)
    kx, kp = jax.random.split(key)

    N, C_in, C_out = 2, 4, 8
    D = H = W = 8
    kernel_size, stride, padding = 3, 1, 1

    x = jax.random.normal(kx, (N, C_in, D, H, W), dtype=jnp.float32)
    params = init_params(kp, C_in, C_out, kernel_size)

    ew_dtype = _default_elementwise_dtype()
    run = functools.partial(spline_conv3d_forward,
                            kernel_size=kernel_size, stride=stride, padding=padding,
                            elementwise_dtype=ew_dtype)
    out = jax.jit(run)(x, params)
    out = jax.block_until_ready(out)

    ref = reference_forward(x, params, stride=stride, padding=padding)
    assert out.shape == ref.shape == (N, C_out, D, H, W)

    # bf16 MXU operands (and on v6e/v7x a bf16 knot loop) feed the cubic, which amplifies
    # rounding -> tolerance relative to the output scale.
    err = float(jnp.max(jnp.abs(out - ref)))
    scale = float(jnp.max(jnp.abs(ref)))
    assert err <= 5e-2 * max(1.0, scale), (err, scale)

    print("KERNEL_OK")
</pallas_src>

<mosaic_0001>
module attributes {stable_mosaic.version = 11 : i64} {
  func.func @_spline_conv_kernel(%arg0: i32, %arg1: i32, %arg2: i32, %arg3: memref<10xf32, #tpu.memory_space<smem>>, %arg4: memref<1x128x512xbf16, #tpu.memory_space<vmem>>, %arg5: memref<8x128xbf16, #tpu.memory_space<vmem>>, %arg6: memref<8x12xf32, #tpu.memory_space<vmem>>, %arg7: memref<1x8x512xf32, #tpu.memory_space<vmem>>, %arg8: memref<8x512xf32, #tpu.memory_space<vmem>>) attributes {dimension_semantics = [#tpu.dimension_semantics<parallel>, #tpu.dimension_semantics<parallel>, #tpu.dimension_semantics<arbitrary>], iteration_bounds = array<i64: 2, 1, 1>, scalar_prefetch = 0 : i64, scratch_operands = 1 : i64, tpu.core_type = #tpu.core_type<tc>, window_params = [{transform_indices = @transform_0, window_bounds = array<i64: 10>}, {transform_indices = @transform_1, window_bounds = array<i64: 1, 128, 512>}, {transform_indices = @transform_2, window_bounds = array<i64: 8, 128>}, {pipeline_mode = #tpu.pipeline_mode<synchronous>, transform_indices = @transform_3, window_bounds = array<i64: 8, 12>}, {transform_indices = @transform_4, window_bounds = array<i64: 1, 8, 512>}]} {
    %c0_i32 = arith.constant 0 : i32
    %0 = arith.cmpi eq, %arg2, %c0_i32 : i32
    %1 = arith.extui %0 : i1 to i32
    %c0_i32_0 = arith.constant 0 : i32
    %2 = arith.cmpi ne, %1, %c0_i32_0 : i32
    scf.if %2 {
      %cst_11 = arith.constant 0.000000e+00 : f32
      %13 = vector.broadcast %cst_11 : f32 to vector<8x512xf32>
      %c0_12 = arith.constant 0 : index
      %c0_13 = arith.constant 0 : index
      %14 = vector.load %arg8[%c0_12, %c0_13] : memref<8x512xf32, #tpu.memory_space<vmem>>, vector<8x512xf32>
      tpu.vector_store %arg8[%c0_12, %c0_13], %13 {strides = array<i32>} : memref<8x512xf32, #tpu.memory_space<vmem>>, vector<8x512xf32>,
    } else {
    }
    %c0 = arith.constant 0 : index
    %c0_1 = arith.constant 0 : index
    %3 = vector.load %arg8[%c0, %c0_1] : memref<8x512xf32, #tpu.memory_space<vmem>>, vector<8x512xf32>
    %c0_2 = arith.constant 0 : index
    %c0_3 = arith.constant 0 : index
    %4 = vector.load %arg5[%c0_2, %c0_3] : memref<8x128xbf16, #tpu.memory_space<vmem>>, vector<8x128xbf16>
    %c0_4 = arith.constant 0 : index
    %c0_5 = arith.constant 0 : index
    %c0_6 = arith.constant 0 : index
    %5 = vector.load %arg4[%c0_4, %c0_5, %c0_6] : memref<1x128x512xbf16, #tpu.memory_space<vmem>>, vector<1x128x512xbf16>
    %6 = vector.shape_cast %5 : vector<1x128x512xbf16> to vector<128x512xbf16>
    %cst = arith.constant dense<0.000000e+00> : vector<8x512xf32>
    %7 = tpu.matmul %4, %6, %cst {dimension_numbers = #tpu.dot_dimension_numbers<[1], [0], [0], [1], [0, 0, 1, 1], [], []>} : vector<8x128xbf16>, vector<128x512xbf16>, vector<8x512xf32> -> vector<8x512xf32>
    %8 = arith.addf %3, %7 : vector<8x512xf32>
    %c0_7 = arith.constant 0 : index
    %c0_8 = arith.constant 0 : index
    %9 = vector.load %arg8[%c0_7, %c0_8] : memref<8x512xf32, #tpu.memory_space<vmem>>, vector<8x512xf32>
    tpu.vector_store %arg8[%c0_7, %c0_8], %8 {strides = array<i32>} : memref<8x512xf32, #tpu.memory_space<vmem>>, vector<8x512xf32>,
    %c0_i32_9 = arith.constant 0 : i32
    %10 = arith.cmpi eq, %arg2, %c0_i32_9 : i32
    %11 = arith.extui %10 : i1 to i32
    %c0_i32_10 = arith.constant 0 : i32
    %12 = arith.cmpi ne, %11, %c0_i32_10 : i32
    scf.if %12 {
      %c0_11 = arith.constant 0 : index
      %c0_12 = arith.constant 0 : index
      %13 = vector.load %arg6[%c0_11, %c0_12] : memref<8x12xf32, #tpu.memory_space<vmem>>, vector<8x12xf32>
      %c0_13 = arith.constant 0 : index
      %c0_14 = arith.constant 0 : index
      %14 = vector.load %arg8[%c0_13, %c0_14] : memref<8x512xf32, #tpu.memory_space<vmem>>, vector<8x512xf32>
      %15 = vector.extract_strided_slice %13 {offsets = [0, 10], sizes = [8, 1], strides = [1, 1]} : vector<8x12xf32> to vector<8x1xf32>
      %16 = vector.broadcast %15 : vector<8x1xf32> to vector<8x512xf32>
      %17 = arith.addf %14, %16 : vector<8x512xf32>
      %cst_15 = arith.constant 5.000000e-01 : f32
      %18 = vector.broadcast %cst_15 : f32 to vector<8x512xf32>
      %19 = arith.mulf %18, %17 : vector<8x512xf32>
      %cst_16 = arith.constant 5.000000e-01 : f32
      %20 = vector.broadcast %cst_16 : f32 to vector<8x512xf32>
      %21 = arith.mulf %20, %17 : vector<8x512xf32>
      %22 = math.tanh %21 : vector<8x512xf32>
      %cst_17 = arith.constant 1.000000e+00 : f32
      %23 = vector.broadcast %cst_17 : f32 to vector<8x512xf32>
      %24 = arith.addf %23, %22 : vector<8x512xf32>
      %25 = arith.mulf %19, %24 : vector<8x512xf32>
      %26 = vector.extract_strided_slice %13 {offsets = [0, 0], sizes = [8, 10], strides = [1, 1]} : vector<8x12xf32> to vector<8x10xf32>
      %cst_18 = arith.constant 0.000000e+00 : f32
      %27 = vector.broadcast %cst_18 : f32 to vector<8x512xf32>
      %c0_19 = arith.constant 0 : index
      %28 = memref.load %arg3[%c0_19] : memref<10xf32, #tpu.memory_space<smem>>
      %29 = vector.broadcast %28 : f32 to vector<8x512xf32>
      %30 = arith.subf %17, %29 : vector<8x512xf32>
      %cst_20 = arith.constant 0.000000e+00 : f32
      %31 = vector.broadcast %cst_20 : f32 to vector<8x512xf32>
      %32 = arith.maximumf %30, %31 : vector<8x512xf32>
      %33 = arith.mulf %32, %32 : vector<8x512xf32>
      %34 = arith.mulf %33, %32 : vector<8x512xf32>
      %35 = vector.extract_strided_slice %26 {offsets = [0, 0], sizes = [8, 1], strides = [1, 1]} : vector<8x10xf32> to vector<8x1xf32>
      %36 = vector.broadcast %35 : vector<8x1xf32> to vector<8x512xf32>
      %37 = arith.mulf %34, %36 : vector<8x512xf32>
      %38 = arith.addf %27, %37 : vector<8x512xf32>
      %c1 = arith.constant 1 : index
      %39 = memref.load %arg3[%c1] : memref<10xf32, #tpu.memory_space<smem>>
      %40 = vector.broadcast %39 : f32 to vector<8x512xf32>
      %41 = arith.subf %17, %40 : vector<8x512xf32>
      %cst_21 = arith.constant 0.000000e+00 : f32
      %42 = vector.broadcast %cst_21 : f32 to vector<8x512xf32>
      %43 = arith.maximumf %41, %42 : vector<8x512xf32>
      %44 = arith.mulf %43, %43 : vector<8x512xf32>
      %45 = arith.mulf %44, %43 : vector<8x512xf32>
      %46 = vector.extract_strided_slice %26 {offsets = [0, 1], sizes = [8, 1], strides = [1, 1]} : vector<8x10xf32> to vector<8x1xf32>
      %47 = vector.broadcast %46 : vector<8x1xf32> to vector<8x512xf32>
      %48 = arith.mulf %45, %47 : vector<8x512xf32>
      %49 = arith.addf %38, %48 : vector<8x512xf32>
      %c2 = arith.constant 2 : index
      %50 = memref.load %arg3[%c2] : memref<10xf32, #tpu.memory_space<smem>>
      %51 = vector.broadcast %50 : f32 to vector<8x512xf32>
      %52 = arith.subf %17, %51 : vector<8x512xf32>
      %cst_22 = arith.constant 0.000000e+00 : f32
      %53 = vector.broadcast %cst_22 : f32 to vector<8x512xf32>
      %54 = arith.maximumf %52, %53 : vector<8x512xf32>
      %55 = arith.mulf %54, %54 : vector<8x512xf32>
      %56 = arith.mulf %55, %54 : vector<8x512xf32>
      %57 = vector.extract_strided_slice %26 {offsets = [0, 2], sizes = [8, 1], strides = [1, 1]} : vector<8x10xf32> to vector<8x1xf32>
      %58 = vector.broadcast %57 : vector<8x1xf32> to vector<8x512xf32>
      %59 = arith.mulf %56, %58 : vector<8x512xf32>
      %60 = arith.addf %49, %59 : vector<8x512xf32>
      %c3 = arith.constant 3 : index
      %61 = memref.load %arg3[%c3] : memref<10xf32, #tpu.memory_space<smem>>
      %62 = vector.broadcast %61 : f32 to vector<8x512xf32>
      %63 = arith.subf %17, %62 : vector<8x512xf32>
      %cst_23 = arith.constant 0.000000e+00 : f32
      %64 = vector.broadcast %cst_23 : f32 to vector<8x512xf32>
      %65 = arith.maximumf %63, %64 : vector<8x512xf32>
      %66 = arith.mulf %65, %65 : vector<8x512xf32>
      %67 = arith.mulf %66, %65 : vector<8x512xf32>
      %68 = vector.extract_strided_slice %26 {offsets = [0, 3], sizes = [8, 1], strides = [1, 1]} : vector<8x10xf32> to vector<8x1xf32>
      %69 = vector.broadcast %68 : vector<8x1xf32> to vector<8x512xf32>
      %70 = arith.mulf %67, %69 : vector<8x512xf32>
      %71 = arith.addf %60, %70 : vector<8x512xf32>
      %c4 = arith.constant 4 : index
      %72 = memref.load %arg3[%c4] : memref<10xf32, #tpu.memory_space<smem>>
      %73 = vector.broadcast %72 : f32 to vector<8x512xf32>
      %74 = arith.subf %17, %73 : vector<8x512xf32>
      %cst_24 = arith.constant 0.000000e+00 : f32
      %75 = vector.broadcast %cst_24 : f32 to vector<8x512xf32>
      %76 = arith.maximumf %74, %75 : vector<8x512xf32>
      %77 = arith.mulf %76, %76 : vector<8x512xf32>
      %78 = arith.mulf %77, %76 : vector<8x512xf32>
      %79 = vector.extract_strided_slice %26 {offsets = [0, 4], sizes = [8, 1], strides = [1, 1]} : vector<8x10xf32> to vector<8x1xf32>
      %80 = vector.broadcast %79 : vector<8x1xf32> to vector<8x512xf32>
      %81 = arith.mulf %78, %80 : vector<8x512xf32>
      %82 = arith.addf %71, %81 : vector<8x512xf32>
      %c5 = arith.constant 5 : index
      %83 = memref.load %arg3[%c5] : memref<10xf32, #tpu.memory_space<smem>>
      %84 = vector.broadcast %83 : f32 to vector<8x512xf32>
      %85 = arith.subf %17, %84 : vector<8x512xf32>
      %cst_25 = arith.constant 0.000000e+00 : f32
      %86 = vector.broadcast %cst_25 : f32 to vector<8x512xf32>
      %87 = arith.maximumf %85, %86 : vector<8x512xf32>
      %88 = arith.mulf %87, %87 : vector<8x512xf32>
      %89 = arith.mulf %88, %87 : vector<8x512xf32>
      %90 = vector.extract_strided_slice %26 {offsets = [0, 5], sizes = [8, 1], strides = [1, 1]} : vector<8x10xf32> to vector<8x1xf32>
      %91 = vector.broadcast %90 : vector<8x1xf32> to vector<8x512xf32>
      %92 = arith.mulf %89, %91 : vector<8x512xf32>
      %93 = arith.addf %82, %92 : vector<8x512xf32>
      %c6 = arith.constant 6 : index
      %94 = memref.load %arg3[%c6] : memref<10xf32, #tpu.memory_space<smem>>
      %95 = vector.broadcast %94 : f32 to vector<8x512xf32>
      %96 = arith.subf %17, %95 : vector<8x512xf32>
      %cst_26 = arith.constant 0.000000e+00 : f32
      %97 = vector.broadcast %cst_26 : f32 to vector<8x512xf32>
      %98 = arith.maximumf %96, %97 : vector<8x512xf32>
      %99 = arith.mulf %98, %98 : vector<8x512xf32>
      %100 = arith.mulf %99, %98 : vector<8x512xf32>
      %101 = vector.extract_strided_slice %26 {offsets = [0, 6], sizes = [8, 1], strides = [1, 1]} : vector<8x10xf32> to vector<8x1xf32>
      %102 = vector.broadcast %101 : vector<8x1xf32> to vector<8x512xf32>
      %103 = arith.mulf %100, %102 : vector<8x512xf32>
      %104 = arith.addf %93, %103 : vector<8x512xf32>
      %c7 = arith.constant 7 : index
      %105 = memref.load %arg3[%c7] : memref<10xf32, #tpu.memory_space<smem>>
      %106 = vector.broadcast %105 : f32 to vector<8x512xf32>
      %107 = arith.subf %17, %106 : vector<8x512xf32>
      %cst_27 = arith.constant 0.000000e+00 : f32
      %108 = vector.broadcast %cst_27 : f32 to vector<8x512xf32>
      %109 = arith.maximumf %107, %108 : vector<8x512xf32>
      %110 = arith.mulf %109, %109 : vector<8x512xf32>
      %111 = arith.mulf %110, %109 : vector<8x512xf32>
      %112 = vector.extract_strided_slice %26 {offsets = [0, 7], sizes = [8, 1], strides = [1, 1]} : vector<8x10xf32> to vector<8x1xf32>
      %113 = vector.broadcast %112 : vector<8x1xf32> to vector<8x512xf32>
      %114 = arith.mulf %111, %113 : vector<8x512xf32>
      %115 = arith.addf %104, %114 : vector<8x512xf32>
      %c8 = arith.constant 8 : index
      %116 = memref.load %arg3[%c8] : memref<10xf32, #tpu.memory_space<smem>>
      %117 = vector.broadcast %116 : f32 to vector<8x512xf32>
      %118 = arith.subf %17, %117 : vector<8x512xf32>
      %cst_28 = arith.constant 0.000000e+00 : f32
      %119 = vector.broadcast %cst_28 : f32 to vector<8x512xf32>
      %120 = arith.maximumf %118, %119 : vector<8x512xf32>
      %121 = arith.mulf %120, %120 : vector<8x512xf32>
      %122 = arith.mulf %121, %120 : vector<8x512xf32>
      %123 = vector.extract_strided_slice %26 {offsets = [0, 8], sizes = [8, 1], strides = [1, 1]} : vector<8x10xf32> to vector<8x1xf32>
      %124 = vector.broadcast %123 : vector<8x1xf32> to vector<8x512xf32>
      %125 = arith.mulf %122, %124 : vector<8x512xf32>
      %126 = arith.addf %115, %125 : vector<8x512xf32>
      %c9 = arith.constant 9 : index
      %127 = memref.load %arg3[%c9] : memref<10xf32, #tpu.memory_space<smem>>
      %128 = vector.broadcast %127 : f32 to vector<8x512xf32>
      %129 = arith.subf %17, %128 : vector<8x512xf32>
      %cst_29 = arith.constant 0.000000e+00 : f32
      %130 = vector.broadcast %cst_29 : f32 to vector<8x512xf32>
      %131 = arith.maximumf %129, %130 : vector<8x512xf32>
      %132 = arith.mulf %131, %131 : vector<8x512xf32>
      %133 = arith.mulf %132, %131 : vector<8x512xf32>
      %134 = vector.extract_strided_slice %26 {offsets = [0, 9], sizes = [8, 1], strides = [1, 1]} : vector<8x10xf32> to vector<8x1xf32>
      %135 = vector.broadcast %134 : vector<8x1xf32> to vector<8x512xf32>
      %136 = arith.mulf %133, %135 : vector<8x512xf32>
      %137 = arith.addf %126, %136 : vector<8x512xf32>
      %138 = vector.extract_strided_slice %13 {offsets = [0, 11], sizes = [8, 1], strides = [1, 1]} : vector<8x12xf32> to vector<8x1xf32>
      %139 = vector.broadcast %138 : vector<8x1xf32> to vector<8x512xf32>
      %140 = arith.mulf %139, %25 : vector<8x512xf32>
      %141 = arith.addf %137, %140 : vector<8x512xf32>
      %c0_30 = arith.constant 0 : index
      %c0_31 = arith.constant 0 : index
      %c0_32 = arith.constant 0 : index
      %142 = vector.load %arg7[%c0_30, %c0_31, %c0_32] : memref<1x8x512xf32, #tpu.memory_space<vmem>>, vector<1x8x512xf32>
      %143 = vector.shape_cast %142 : vector<1x8x512xf32> to vector<8x512xf32>
      %144 = vector.shape_cast %141 : vector<8x512xf32> to vector<1x8x512xf32>
      tpu.vector_store %arg7[%c0_30, %c0_31, %c0_32], %144 {strides = array<i32>} : memref<1x8x512xf32, #tpu.memory_space<vmem>>, vector<1x8x512xf32>,
    } else {
    }
    return
  }
  func.func @transform_0(%arg0: i32, %arg1: i32, %arg2: i32) -> i32 {
    %c0_i32 = arith.constant 0 : i32
    %c0_i32_0 = arith.constant 0 : i32
    return %c0_i32 : i32
  }
  func.func @transform_1(%arg0: i32, %arg1: i32, %arg2: i32) -> (i32, i32, i32) {
    %c0_i32 = arith.constant 0 : i32
    return %arg0, %arg2, %arg1 : i32, i32, i32
  }
  func.func @transform_2(%arg0: i32, %arg1: i32, %arg2: i32) -> (i32, i32) {
    %c0_i32 = arith.constant 0 : i32
    %c0_i32_0 = arith.constant 0 : i32
    return %c0_i32, %arg2 : i32, i32
  }
  func.func @transform_3(%arg0: i32, %arg1: i32, %arg2: i32) -> (i32, i32) {
    %c0_i32 = arith.constant 0 : i32
    %c0_i32_0 = arith.constant 0 : i32
    %c0_i32_1 = arith.constant 0 : i32
    return %c0_i32, %c0_i32_0 : i32, i32
  }
  func.func @transform_4(%arg0: i32, %arg1: i32, %arg2: i32) -> (i32, i32, i32) {
    %c0_i32 = arith.constant 0 : i32
    %c0_i32_0 = arith.constant 0 : i32
    return %arg0, %c0_i32, %arg1 : i32, i32, i32
  }
}

</mosaic_0001>

<llo_original>
// kernel: spline_conv3d_forward.1
$region0: #{spline_conv3d_forward.1}
  #allocation0 [shape = 'u32[]', space=smem, size = 0x4, offset = 0x4, fixed_abs, tag = 'smem constant byte address 0x4 - core index']
  #allocation1 [shape = 'u32[144,128]{1,0:T(1,128)}', space=vmem, size = 0x12000, scoped, tag = 'internal scratch']
  #allocation2 [shape = 'f32[8,512]{1,0:T(8,128)}', space=vmem, size = 0x4000, scoped, tag = 'scratch operand']
  %s0 = inlined_call_operand.vmem [shape: f32[10], index: 0, kind: input, shape index: {}]
  %s1 = inlined_call_operand.vmem [shape: bf16[2,128,512], index: 1, kind: input, shape index: {}]
  %s2 = inlined_call_operand.vmem [shape: bf16[8,128], index: 2, kind: input, shape index: {}]
  %s3 = inlined_call_operand.vmem [shape: f32[8,12], index: 3, kind: input, shape index: {}]
  %s4 = inlined_call_operand.vmem [shape: f32[2,8,512], index: 4, kind: output, shape index: {}]
  %s5 = sld [smem:[#allocation0]]
  $region61: #{spline_conv3d_forward.1} parent=0
    _
  %s7 = ssub.s32 1, %s5
  %s8 = scalar_select 0, %s7, %s5
  $region1: #{spline_conv3d_forward.1} parent=0
    #allocation3 [shape = 'u8[512]{0}', space=smem, size = 0x200, scoped, tag = 'input window, operand 0, single buffered']
    #allocation4 [shape = 's32[2]{0}', space=sflag, size = 0x8, scoped, tag = 'scoped memory for spline_conv3d_forward.1']
    %9 = vsyncpa [#allocation4], 0
    loop: start=0, step=1, limit=4
    $region2: #{spline_conv3d_forward.1} parent=1 // loop_pre_header
      _
    $region3: #{spline_conv3d_forward.1} parent=1 // loop_header
      %s11 = sphi 0, %s15
      %p12 = scmp.ge.s32.totalorder %s11, 4
      %s18 = sphi 0, %s37
      %s19 = sphi 0, %s33
      %s20 = sphi 0, %s29
      %s21 = sphi 0, %s18
      %s22 = sphi 0, %s19
      %s23 = sphi 0, %s20
      %s24 = sphi 0, %s21
      %s25 = sphi 0, %s22
      %s26 = sphi 0, %s23
      %s38 = sphi 0, %s38
      %s40 = sphi 0, %s38
      %s41 = sphi 0, %s40
      %s55 = sphi 0, %s41
      %s65 = sphi 0, %s67
      %s68 = sphi 0, %s65
      %s69 = sphi 0, %s68
      %s85 = sphi 0, %s69
      %s91 = sphi 0, %s93
      %s94 = sphi 0, %s91
      %s95 = sphi 0, %s94
      %s111 = sphi 0, %s95
      %s115 = sphi 0, %s115
      %s117 = sphi 0, %s115
      %s118 = sphi 0, %s117
      %s132 = sphi 0, %s118
      %s140 = sphi 0, %s142
      %s143 = sphi 0, %s140
      %s144 = sphi 0, %s143
      %s160 = sphi 0, %s144
    $region4: #{spline_conv3d_forward.1} parent=1 // loop_header_branch
      %14 = sbr.rel (%p12) target = $region8
    $region5: #{spline_conv3d_forward.1} parent=1 // loop_body
      %s16 = ssub.s32 %s11, 1
      %s17 = ssub.s32 %s11, 2
      %s27 = sadd.s32 1, %s20
      %p28 = scmp.ge.s32.totalorder %s27, 1
      %s29 = scalar_select %p28, 0, %s27
      %s30 = sadd.s32 1, %s19
      %s31 = scalar_select %p28, %s30, %s19
      %p32 = scmp.ge.s32.totalorder %s31, 1
      %s33 = scalar_select %p32, 0, %s31
      %s34 = sadd.s32 1, %s18
      %s35 = scalar_select %p32, %s34, %s18
      %p36 = scmp.ge.s32.totalorder %s35, 2
      %s37 = scalar_select %p36, 0, %s35
      %s39 = sadd.s32 %s38, 1
      %p42 = scmp.eq.s32.totalorder %s11, 1
      %p43 = scmp.ne.s32.totalorder %s38, %s40
      %p44 = scmp.eq.s32.totalorder %s11, 0
      %p45 = por %p43, %p44
      %p46 = scmp.ne.s32.totalorder %s38, %s40
      %p47 = scmp.eq.s32.totalorder %s16, 1
      %p48 = por %p46, %p47
      %p49 = scmp.ne.s32.totalorder %s40, %s41
      %p50 = scmp.eq.s32.totalorder %s16, 0
      %p51 = por %p49, %p50
      %p52 = scmp.ne.s32.totalorder %s40, %s41
      %p53 = scmp.eq.s32.totalorder %s17, 1
      %p54 = por %p52, %p53
      %p56 = scmp.ne.s32.totalorder %s41, %s55
      %p57 = scmp.eq.s32.totalorder %s17, 0
      %p58 = por %p56, %p57
      %s59 = ssub.s32 %s18, %s37
      %s60 = ssub.s32 %s20, %s29
      %s61 = sor.u32 %s59, %s60
      %s62 = ssub.s32 %s19, %s33
      %s63 = sor.u32 %s61, %s62
      %p64 = scmp.eq.s32.totalorder %s63, 0
      %s66 = sadd.s32 %s65, 1
      %s67 = scalar_select %p64, %s65, %s66
      %p70 = pneg %p64
      %p71 = scmp.eq.s32.totalorder %s11, 1
      %p72 = por %p70, %p71
      %p73 = scmp.ne.s32.totalorder %s65, %s68
      %p74 = scmp.eq.s32.totalorder %s11, 0
      %p75 = por %p73, %p74
      %p76 = scmp.ne.s32.totalorder %s65, %s68
      %p77 = scmp.eq.s32.totalorder %s16, 1
      %p78 = por %p76, %p77
      %p79 = scmp.ne.s32.totalorder %s68, %s69
      %p80 = scmp.eq.s32.totalorder %s16, 0
      %p81 = por %p79, %p80
      %p82 = scmp.ne.s32.totalorder %s68, %s69
      %p83 = scmp.eq.s32.totalorder %s17, 1
      %p84 = por %p82, %p83
      %p86 = scmp.ne.s32.totalorder %s69, %s85
      %p87 = scmp.eq.s32.totalorder %s17, 0
      %p88 = por %p86, %p87
      %s89 = ssub.s32 %s20, %s29
      %p90 = scmp.eq.s32.totalorder %s89, 0
      %s92 = sadd.s32 %s91, 1
      %s93 = scalar_select %p90, %s91, %s92
      %p96 = pneg %p90
      %p97 = scmp.eq.s32.totalorder %s11, 1
      %p98 = por %p96, %p97
      %p99 = scmp.ne.s32.totalorder %s91, %s94
      %p100 = scmp.eq.s32.totalorder %s11, 0
      %p101 = por %p99, %p100
      %p102 = scmp.ne.s32.totalorder %s91, %s94
      %p103 = scmp.eq.s32.totalorder %s16, 1
      %p104 = por %p102, %p103
      %p105 = scmp.ne.s32.totalorder %s94, %s95
      %p106 = scmp.eq.s32.totalorder %s16, 0
      %p107 = por %p105, %p106
      %p108 = scmp.ne.s32.totalorder %s94, %s95
      %p109 = scmp.eq.s32.totalorder %s17, 1
      %p110 = por %p108, %p109
      %p112 = scmp.ne.s32.totalorder %s95, %s111
      %p113 = scmp.eq.s32.totalorder %s17, 0
      %p114 = por %p112, %p113
      %s116 = sadd.s32 %s115, 1
      %p119 = scmp.eq.s32.totalorder %s11, 1
      %p120 = scmp.ne.s32.totalorder %s115, %s117
      %p121 = scmp.eq.s32.totalorder %s11, 0
      %p122 = por %p120, %p121
      %p123 = scmp.ne.s32.totalorder %s115, %s117
      %p124 = scmp.eq.s32.totalorder %s16, 1
      %p125 = por %p123, %p124
      %p126 = scmp.ne.s32.totalorder %s117, %s118
      %p127 = scmp.eq.s32.totalorder %s16, 0
      %p128 = por %p126, %p127
      %p129 = scmp.ne.s32.totalorder %s117, %s118
      %p130 = scmp.eq.s32.totalorder %s17, 1
      %p131 = por %p129, %p130
      %p133 = scmp.ne.s32.totalorder %s118, %s132
      %p134 = scmp.eq.s32.totalorder %s17, 0
      %p135 = por %p133, %p134
      %s136 = ssub.s32 %s18, %s37
      %s137 = ssub.s32 %s19, %s33
      %s138 = sor.u32 %s136, %s137
      %p139 = scmp.eq.s32.totalorder %s138, 0
      %s141 = sadd.s32 %s140, 1
      %s142 = scalar_select %p139, %s140, %s141
      %p145 = pneg %p139
      %p146 = scmp.eq.s32.totalorder %s11, 1
      %p147 = por %p145, %p146
      %p148 = scmp.ne.s32.totalorder %s140, %s143
      %p149 = scmp.eq.s32.totalorder %s11, 0
      %p150 = por %p148, %p149
      %p151 = scmp.ne.s32.totalorder %s140, %s143
      %p152 = scmp.eq.s32.totalorder %s16, 1
      %p153 = por %p151, %p152
      %p154 = scmp.ne.s32.totalorder %s143, %s144
      %p155 = scmp.eq.s32.totalorder %s16, 0
      %p156 = por %p154, %p155
      %p157 = scmp.ne.s32.totalorder %s143, %s144
      %p158 = scmp.eq.s32.totalorder %s17, 1
      %p159 = por %p157, %p158
      %p161 = scmp.ne.s32.totalorder %s144, %s160
      %p162 = scmp.eq.s32.totalorder %s17, 0
      %p163 = por %p161, %p162
      %p164 = scmp.le.s32.totalorder 1, %s11
      %p165 = scmp.lt.s32.totalorder %s11, 3
      %p166 = pnand %p164, %p165
      %p167 = pneg %p166
      // Predicated region
      $region9: #{spline_conv3d_forward.1} parent=5 // pred_check
        _
      $region10: #{spline_conv3d_forward.1} parent=5 // pred_check_branch
        %169 = sbr.rel (%p166) target = $region12
      $region11: #{spline_conv3d_forward.1} parent=5 // pred_region
        %s170 = ssub.s32 %s11, 1
        // Predicated region
        $region13: #{spline_conv3d_forward.1} parent=11 // pred_check
          %p171 = pneg %p51
        $region14: #{spline_conv3d_forward.1} parent=11 // pred_check_branch
          %173 = sbr.rel (%p171) target = $region16
        $region15: #{spline_conv3d_forward.1} parent=11 // pred_region
          %s175 = ssub.s32 16, 16
          %176 = vsyncadd [#allocation4], %s175
          %s178 = sshll.u32 %s0, 4
          %s179 = int_to_ptr.vmem [resolvable:$true] %s178
          %181 = dma.vmem_to_smem %s179, 16, [#allocation3], [#allocation4]
        $region16: #{spline_conv3d_forward.1} parent=11 // pred_fallthru
          _
        // Predicated region
        $region17: #{spline_conv3d_forward.1} parent=11 // pred_check
          %p182 = pneg %p107
        $region18: #{spline_conv3d_forward.1} parent=11 // pred_check_branch
          %184 = sbr.rel (%p182) target = $region20
        $region19: #{spline_conv3d_forward.1} parent=11 // pred_region
          %p185 = scmp.lt.s32.totalorder %s23, 0
          %s186 = scalar_select %p185, %s23, 0
          %s187 = smul.addr %s186, 4
          %s188 = scalar_lea.vmem %s2, %s187
        $region20: #{spline_conv3d_forward.1} parent=11 // pred_fallthru
          _
        // Predicated region
        $region21: #{spline_conv3d_forward.1} parent=11 // pred_check
          %p189 = pneg %p128
        $region22: #{spline_conv3d_forward.1} parent=11 // pred_check_branch
          %191 = sbr.rel (%p189) target = $region24
        $region23: #{spline_conv3d_forward.1} parent=11 // pred_region
          _
        $region24: #{spline_conv3d_forward.1} parent=11 // pred_fallthru
          _
      $region12: #{spline_conv3d_forward.1} parent=5 // pred_fallthru
        _
      %p192 = scmp.lt.s32.totalorder %s11, 2
      // Predicated region
      $region25: #{spline_conv3d_forward.1} parent=5 // pred_check
        %p193 = pneg %p192
      $region26: #{spline_conv3d_forward.1} parent=5 // pred_check_branch
        %195 = sbr.rel (%p193) target = $region28
      $region27: #{spline_conv3d_forward.1} parent=5 // pred_region
        // Predicated region
        $region29: #{spline_conv3d_forward.1} parent=27 // pred_check
          %p196 = pneg %p75
        $region30: #{spline_conv3d_forward.1} parent=27 // pred_check_branch
          %198 = sbr.rel (%p196) target = $region32
        $region31: #{spline_conv3d_forward.1} parent=27 // pred_region
          %s199 = smul.u32 16, %s20
          %s200 = smul.u32 4, %s19
          %p201 = scmp.lt.s32.totalorder %s18, 1
          %s202 = scalar_select %p201, %s18, 1
          %p203 = scmp.lt.s32.totalorder %s199, 15
          %s204 = scalar_select %p203, %s199, 15
          %p205 = scmp.lt.s32.totalorder %s200, 3
          %s206 = scalar_select %p205, %s200, 3
          %s207 = smul.addr %s204, 4
          %s208 = sadd.s32 %s206, %s207
          %s209 = smul.addr %s202, 64
          %s210 = sadd.s32 %s208, %s209
          %s211 = smul.addr %s210, 4
          %s212 = scalar_lea.vmem %s1, %s211
          %s213 = smul.u32 16, %s20
          %s214 = smul.u32 4, %s19
        $region32: #{spline_conv3d_forward.1} parent=27 // pred_fallthru
          _
      $region28: #{spline_conv3d_forward.1} parent=5 // pred_fallthru
        _
      %p215 = scmp.le.s32.totalorder 1, %s11
      %p216 = scmp.lt.s32.totalorder %s11, 3
      %p217 = pnand %p215, %p216
      %p218 = pneg %p217
      // Predicated region
      $region33: #{spline_conv3d_forward.1} parent=5 // pred_check
        _
      $region34: #{spline_conv3d_forward.1} parent=5 // pred_check_branch
        %220 = sbr.rel (%p217) target = $region36
      $region35: #{spline_conv3d_forward.1} parent=5 // pred_region
        %s221 = ssub.s32 %s11, 1
        // Predicated region
        $region37: #{spline_conv3d_forward.1} parent=35 // pred_check
          %p222 = pneg %p51
        $region38: #{spline_conv3d_forward.1} parent=35 // pred_check_branch
          %224 = sbr.rel (%p222) target = $region40
        $region39: #{spline_conv3d_forward.1} parent=35 // pred_region
          %225 = dma.done [#allocation4], 16
        $region40: #{spline_conv3d_forward.1} parent=35 // pred_fallthru
          _
        %226 = sfence
        %p227 = pneg %p51
        %p228 = pneg %p48
        %s229 = smul.u32 16, %s23
        %s230 = smul.u32 4, %s22
        %p231 = scmp.lt.s32.totalorder %s21, 1
        %s232 = scalar_select %p231, %s21, 1
        %p233 = scmp.lt.s32.totalorder %s229, 15
        %s234 = scalar_select %p233, %s229, 15
        %p235 = scmp.lt.s32.totalorder %s230, 3
        %s236 = scalar_select %p235, %s230, 3
        %s237 = smul.addr %s234, 4
        %s238 = sadd.s32 %s236, %s237
        %s239 = smul.addr %s232, 64
        %s240 = sadd.s32 %s238, %s239
        %s241 = smul.addr %s240, 4
        %s242 = scalar_lea.vmem %s1, %s241
        %p243 = pneg %p81
        %p244 = pneg %p78
        %p245 = scmp.lt.s32.totalorder %s23, 0
        %s246 = scalar_select %p245, %s23, 0
        %s247 = smul.addr %s246, 4
        %s248 = scalar_lea.vmem %s2, %s247
        %p249 = pneg %p107
        %p250 = pneg %p104
        %p251 = pneg %p128
        %p252 = pneg %p125
        %p253 = pneg %p156
        %p254 = pneg %p153
        %s255 = smul.u32 4, %s22
        %p256 = scmp.lt.s32.totalorder %s21, 1
        %s257 = scalar_select %p256, %s21, 1
        %p258 = scmp.lt.s32.totalorder %s255, 3
        %s259 = scalar_select %p258, %s255, 3
        %s260 = smul.addr %s257, 4
        %s261 = sadd.s32 %s259, %s260
        %s262 = smul.addr %s261, 8
        %s263 = scalar_lea.vmem %s4, %s262
        %s264 = smul.u32 16, %s23
        %s265 = smul.u32 4, %s22
        %p266 = scmp.lt.s32.totalorder %s21, 1
        %s267 = scalar_select %p266, %s21, 1
        %p268 = scmp.lt.s32.totalorder %s264, 15
        %s269 = scalar_select %p268, %s264, 15
        %p270 = scmp.lt.s32.totalorder %s265, 3
        %s271 = scalar_select %p270, %s265, 3
        %s272 = smul.addr %s269, 4
        %s273 = sadd.s32 %s271, %s272
        %s274 = smul.addr %s267, 64
        %s275 = sadd.s32 %s273, %s274
        %s276 = smul.addr %s275, 4
        %s277 = scalar_lea.vmem %s1, %s276
        %s278 = smul.u32 16, %s23
        %s279 = smul.u32 4, %s22
        %p280 = scmp.lt.s32.totalorder %s23, 0
        %s281 = scalar_select %p280, %s23, 0
        %s282 = smul.addr %s281, 4
        %s283 = scalar_lea.vmem %s2, %s282
        %s284 = smul.u32 4, %s22
        %p285 = scmp.lt.s32.totalorder %s21, 1
        %s286 = scalar_select %p285, %s21, 1
        %p287 = scmp.lt.s32.totalorder %s284, 3
        %s288 = scalar_select %p287, %s284, 3
        %s289 = smul.addr %s286, 4
        %s290 = sadd.s32 %s288, %s289
        %s291 = smul.addr %s290, 8
        %s292 = scalar_lea.vmem %s4, %s291
        %s293 = smul.u32 4, %s22
        %p295 = scmp.eq.s32.totalorder %s23, 0
        // Predicated region
        $region41: #{spline_conv3d_forward.1} parent=35 // pred_check
          %p296 = pneg %p295
        $region42: #{spline_conv3d_forward.1} parent=35 // pred_check_branch
          %298 = sbr.rel (%p296) target = $region44
        $region43: #{spline_conv3d_forward.1} parent=35 // pred_region
          %299 = vst [vmem:[#allocation2] sm:$0xff] 0.0
          %300 = vst [vmem:[#allocation2 + $0x8] sm:$0xff] 0.0
          %301 = vst [vmem:[#allocation2 + $0x10] sm:$0xff] 0.0
          %302 = vst [vmem:[#allocation2 + $0x18] sm:$0xff] 0.0
        $region44: #{spline_conv3d_forward.1} parent=35 // pred_fallthru
          _
        %v303 = vld [vmem:[#allocation2] sm:$0xff]
        %v304 = vld [vmem:[#allocation2 + $0x8] sm:$0xff]
        %v305 = vld [vmem:[#allocation2 + $0x10] sm:$0xff]
        %v306 = vld [vmem:[#allocation2 + $0x18] sm:$0xff]
        %v307 = vld [vmem:[%s283] sm:$0xf]
        %v308 = vld [vmem:[%s277] sm:$0xff]
        %v309 = vld [vmem:[%s277 + $0x8] sm:$0xff]
        %v310 = vld [vmem:[%s277 + $0x10] sm:$0xff]
        %v311 = vld [vmem:[%s277 + $0x18] sm:$0xff]
        %v312 = vld [vmem:[%s277 + $0x20] sm:$0xff]
        %v313 = vld [vmem:[%s277 + $0x28] sm:$0xff]
        %v314 = vld [vmem:[%s277 + $0x30] sm:$0xff]
        %v315 = vld [vmem:[%s277 + $0x38] sm:$0xff]
        %v316 = vld [vmem:[%s277 + $0x40] sm:$0xff]
        %v317 = vld [vmem:[%s277 + $0x48] sm:$0xff]
        %v318 = vld [vmem:[%s277 + $0x50] sm:$0xff]
        %v319 = vld [vmem:[%s277 + $0x58] sm:$0xff]
        %v320 = vld [vmem:[%s277 + $0x60] sm:$0xff]
        %v321 = vld [vmem:[%s277 + $0x68] sm:$0xff]
        %v322 = vld [vmem:[%s277 + $0x70] sm:$0xff]
        %v323 = vld [vmem:[%s277 + $0x78] sm:$0xff]
        %v324 = vld [vmem:[%s277 + $0x80] sm:$0xff]
        %v325 = vld [vmem:[%s277 + $0x88] sm:$0xff]
        %v326 = vld [vmem:[%s277 + $0x90] sm:$0xff]
        %v327 = vld [vmem:[%s277 + $0x98] sm:$0xff]
        %v328 = vld [vmem:[%s277 + $0xa0] sm:$0xff]
        %v329 = vld [vmem:[%s277 + $0xa8] sm:$0xff]
        %v330 = vld [vmem:[%s277 + $0xb0] sm:$0xff]
        %v331 = vld [vmem:[%s277 + $0xb8] sm:$0xff]
        %v332 = vld [vmem:[%s277 + $0xc0] sm:$0xff]
        %v333 = vld [vmem:[%s277 + $0xc8] sm:$0xff]
        %v334 = vld [vmem:[%s277 + $0xd0] sm:$0xff]
        %v335 = vld [vmem:[%s277 + $0xd8] sm:$0xff]
        %v336 = vld [vmem:[%s277 + $0xe0] sm:$0xff]
        %v337 = vld [vmem:[%s277 + $0xe8] sm:$0xff]
        %v338 = vld [vmem:[%s277 + $0xf0] sm:$0xff]
        %v339 = vld [vmem:[%s277 + $0xf8] sm:$0xff]
        %v372 = vunpack.c.l.b16 %v308
        %v373 = vunpack.c.h.b16 %v308
        %v374 = vunpack.c.l.b16 %v309
        %v375 = vunpack.c.h.b16 %v309
        %v376 = vunpack.c.l.b16 %v310
        %v377 = vunpack.c.h.b16 %v310
        %v378 = vunpack.c.l.b16 %v311
        %v379 = vunpack.c.h.b16 %v311
        %v380 = vunpack.c.l.b16 %v312
        %v381 = vunpack.c.h.b16 %v312
        %v382 = vunpack.c.l.b16 %v313
        %v383 = vunpack.c.h.b16 %v313
        %v384 = vunpack.c.l.b16 %v314
        %v385 = vunpack.c.h.b16 %v314
        %v386 = vunpack.c.l.b16 %v315
        %v387 = vunpack.c.h.b16 %v315
        %v388 = vunpack.c.l.b16 %v316
        %v389 = vunpack.c.h.b16 %v316
        %v390 = vunpack.c.l.b16 %v317
        %v391 = vunpack.c.h.b16 %v317
        %v392 = vunpack.c.l.b16 %v318
        %v393 = vunpack.c.h.b16 %v318
        %v394 = vunpack.c.l.b16 %v319
        %v395 = vunpack.c.h.b16 %v319
        %v396 = vunpack.c.l.b16 %v320
        %v397 = vunpack.c.h.b16 %v320
        %v398 = vunpack.c.l.b16 %v321
        %v399 = vunpack.c.h.b16 %v321
        %v400 = vunpack.c.l.b16 %v322
        %v401 = vunpack.c.h.b16 %v322
        %v402 = vunpack.c.l.b16 %v323
        %v403 = vunpack.c.h.b16 %v323
        %v404 = vunpack.c.l.b16 %v324
        %v405 = vunpack.c.h.b16 %v324
        %v406 = vunpack.c.l.b16 %v325
        %v407 = vunpack.c.h.b16 %v325
        %v408 = vunpack.c.l.b16 %v326
        %v409 = vunpack.c.h.b16 %v326
        %v410 = vunpack.c.l.b16 %v327
        %v411 = vunpack.c.h.b16 %v327
        %v412 = vunpack.c.l.b16 %v328
        %v413 = vunpack.c.h.b16 %v328
        %v414 = vunpack.c.l.b16 %v329
        %v415 = vunpack.c.h.b16 %v329
        %v416 = vunpack.c.l.b16 %v330
        %v417 = vunpack.c.h.b16 %v330
        %v418 = vunpack.c.l.b16 %v331
        %v419 = vunpack.c.h.b16 %v331
        %v420 = vunpack.c.l.b16 %v332
        %v421 = vunpack.c.h.b16 %v332
        %v422 = vunpack.c.l.b16 %v333
        %v423 = vunpack.c.h.b16 %v333
        %v424 = vunpack.c.l.b16 %v334
        %v425 = vunpack.c.h.b16 %v334
        %v426 = vunpack.c.l.b16 %v335
        %v427 = vunpack.c.h.b16 %v335
        %v428 = vunpack.c.l.b16 %v336
        %v429 = vunpack.c.h.b16 %v336
        %v430 = vunpack.c.l.b16 %v337
        %v431 = vunpack.c.h.b16 %v337
        %v432 = vunpack.c.l.b16 %v338
        %v433 = vunpack.c.h.b16 %v338
        %v434 = vunpack.c.l.b16 %v339
        %v435 = vunpack.c.h.b16 %v339
        %v436 = vpack.c.b16 %v376, %v372
        %v437 = vpack.c.b16 %v377, %v373
        %v438 = vpack.c.b16 %v378, %v374
        %v439 = vpack.c.b16 %v379, %v375
        %v440 = vpack.c.b16 %v384, %v380
        %v441 = vpack.c.b16 %v385, %v381
        %v442 = vpack.c.b16 %v386, %v382
        %v443 = vpack.c.b16 %v387, %v383
        %v444 = vpack.c.b16 %v392, %v388
        %v445 = vpack.c.b16 %v393, %v389
        %v446 = vpack.c.b16 %v394, %v390
        %v447 = vpack.c.b16 %v395, %v391
        %v448 = vpack.c.b16 %v400, %v396
        %v449 = vpack.c.b16 %v401, %v397
        %v450 = vpack.c.b16 %v402, %v398
        %v451 = vpack.c.b16 %v403, %v399
        %v452 = vpack.c.b16 %v408, %v404
        %v453 = vpack.c.b16 %v409, %v405
        %v454 = vpack.c.b16 %v410, %v406
        %v455 = vpack.c.b16 %v411, %v407
        %v456 = vpack.c.b16 %v416, %v412
        %v457 = vpack.c.b16 %v417, %v413
        %v458 = vpack.c.b16 %v418, %v414
        %v459 = vpack.c.b16 %v419, %v415
        %v460 = vpack.c.b16 %v424, %v420
        %v461 = vpack.c.b16 %v425, %v421
        %v462 = vpack.c.b16 %v426, %v422
        %v463 = vpack.c.b16 %v427, %v423
        %v464 = vpack.c.b16 %v432, %v428
        %v465 = vpack.c.b16 %v433, %v429
        %v466 = vpack.c.b16 %v434, %v430
        %v467 = vpack.c.b16 %v435, %v431
        %500 = vmatprep.subr.bf16.mxu0 %v437
        %501 = vmatpush1.bf16.msra.mxu0 %v436
        %502 = vmatprep.subr.bf16.mxu0 %v441
        %503 = vmatpush1.bf16.msra.mxu0 %v440
        %504 = vmatprep.subr.bf16.mxu0 %v445
        %505 = vmatpush1.bf16.msra.mxu0 %v444
        %506 = vmatprep.subr.bf16.mxu0 %v449
        %507 = vmatpush1.bf16.msra.mxu0 %v448
        %508 = vmatprep.subr.bf16.mxu0 %v453
        %509 = vmatpush1.bf16.msra.mxu0 %v452
        %510 = vmatprep.subr.bf16.mxu0 %v457
        %511 = vmatpush1.bf16.msra.mxu0 %v456
        %512 = vmatprep.subr.bf16.mxu0 %v461
        %513 = vmatpush1.bf16.msra.mxu0 %v460
        %514 = vmatprep.subr.bf16.mxu0 %v465
        %515 = vmatpush1.bf16.msra.mxu0 %v464
        %516 = vmatprep.subr.bf16.mxu0 0
        %517 = vmatpush1.bf16.msra.mxu0 0
        %518 = vmatprep.subr.bf16.mxu0 0
        %519 = vmatpush1.bf16.msra.mxu0 0
        %520 = vmatprep.subr.bf16.mxu0 0
        %521 = vmatpush1.bf16.msra.mxu0 0
        %522 = vmatprep.subr.bf16.mxu0 0
        %523 = vmatpush1.bf16.msra.mxu0 0
        %524 = vmatprep.subr.bf16.mxu0 0
        %525 = vmatpush1.bf16.msra.mxu0 0
        %526 = vmatprep.subr.bf16.mxu0 0
        %527 = vmatpush1.bf16.msra.mxu0 0
        %528 = vmatprep.subr.bf16.mxu0 0
        %529 = vmatpush1.bf16.msra.mxu0 0
        %530 = vmatprep.subr.bf16.mxu0 0
        %531 = vmatpush1.bf16.msra.mxu0 0
        %532 = vmatprep.mubr.bf16.mxu0 0
        %533 = vmatmul.mubr.bf16.gmra.mrb[0].mxu0 %v307
        %v534 = vpop.f32.mrb[0].mxu0
        %v535 = vadd.f32 0.0, %v534
        %v536 = vpop.f32.mrb[0].mxu0
        %v537 = vadd.f32 0.0, %v536
        %v538 = vpop.f32.mrb[0].mxu0
        %v539 = vpop.f32.mrb[0].mxu0
        %540 = vdwg.mxu0
        %541 = vmatprep.subr.bf16.mxu0 %v439
        %542 = vmatpush1.bf16.msra.mxu0 %v438
        %543 = vmatprep.subr.bf16.mxu0 %v443
        %544 = vmatpush1.bf16.msra.mxu0 %v442
        %545 = vmatprep.subr.bf16.mxu0 %v447
        %546 = vmatpush1.bf16.msra.mxu0 %v446
        %547 = vmatprep.subr.bf16.mxu0 %v451
        %548 = vmatpush1.bf16.msra.mxu0 %v450
        %549 = vmatprep.subr.bf16.mxu0 %v455
        %550 = vmatpush1.bf16.msra.mxu0 %v454
        %551 = vmatprep.subr.bf16.mxu0 %v459
        %552 = vmatpush1.bf16.msra.mxu0 %v458
        %553 = vmatprep.subr.bf16.mxu0 %v463
        %554 = vmatpush1.bf16.msra.mxu0 %v462
        %555 = vmatprep.subr.bf16.mxu0 %v467
        %556 = vmatpush1.bf16.msra.mxu0 %v466
        %557 = vmatprep.subr.bf16.mxu0 0
        %558 = vmatpush1.bf16.msra.mxu0 0
        %559 = vmatprep.subr.bf16.mxu0 0
        %560 = vmatpush1.bf16.msra.mxu0 0
        %561 = vmatprep.subr.bf16.mxu0 0
        %562 = vmatpush1.bf16.msra.mxu0 0
        %563 = vmatprep.subr.bf16.mxu0 0
        %564 = vmatpush1.bf16.msra.mxu0 0
        %565 = vmatprep.subr.bf16.mxu0 0
        %566 = vmatpush1.bf16.msra.mxu0 0
        %567 = vmatprep.subr.bf16.mxu0 0
        %568 = vmatpush1.bf16.msra.mxu0 0
        %569 = vmatprep.subr.bf16.mxu0 0
        %570 = vmatpush1.bf16.msra.mxu0 0
        %571 = vmatprep.subr.bf16.mxu0 0
        %572 = vmatpush1.bf16.msra.mxu0 0
        %573 = vmatprep.mubr.bf16.mxu0 0
        %574 = vmatmul.mubr.bf16.gmra.mrb[0].mxu0 %v307
        %v575 = vpop.f32.mrb[0].mxu0
        %v576 = vadd.f32 0.0, %v575
        %v577 = vpop.f32.mrb[0].mxu0
        %v578 = vadd.f32 0.0, %v577
        %v579 = vpop.f32.mrb[0].mxu0
        %v580 = vpop.f32.mrb[0].mxu0
        %581 = vdwg.mxu0
        %v582 = vadd.f32 %v303, %v535
        %v583 = vadd.f32 %v304, %v537
        %v584 = vadd.f32 %v305, %v576
        %v585 = vadd.f32 %v306, %v578
        %586 = vst [vmem:[#allocation2] sm:$0xff] %v582
        %587 = vst [vmem:[#allocation2 + $0x8] sm:$0xff] %v583
        %588 = vst [vmem:[#allocation2 + $0x10] sm:$0xff] %v584
        %589 = vst [vmem:[#allocation2 + $0x18] sm:$0xff] %v585
        // Predicated region
        $region45: #{spline_conv3d_forward.1} parent=35 // pred_check
          %p590 = pneg %p295
        $region46: #{spline_conv3d_forward.1} parent=35 // pred_check_branch
          %592 = sbr.rel (%p590) target = $region48
        $region47: #{spline_conv3d_forward.1} parent=35 // pred_region
          %v593 = vld [vmem:[%s3] sm:$0xff]
          %v594 = vld [vmem:[#allocation2] sm:$0xff]
          %v595 = vld [vmem:[#allocation2 + $0x8] sm:$0xff]
          %v596 = vld [vmem:[#allocation2 + $0x10] sm:$0xff]
          %v597 = vld [vmem:[#allocation2 + $0x18] sm:$0xff]
          %599 = vset.pattern.permute.xlu0 10
          %600 = vperm.xlu0 %599, %v593
          %v601 = vpop.permute.xlu0 %600
          %v603 = vadd.f32 %v594, %v601
          %v604 = vadd.f32 %v595, %v601
          %v605 = vadd.f32 %v596, %v601
          %v606 = vadd.f32 %v597, %v601
          %v607 = vmul.f32 %v603, 0.5
          %v608 = vmul.f32 %v604, 0.5
          %v609 = vmul.f32 %v605, 0.5
          %v610 = vmul.f32 %v606, 0.5
          %v611 = vtanh.pop %v607
          %v612 = vtanh.pop %v608
          %v613 = vtanh.pop %v609
          %v614 = vtanh.pop %v610
          %v615 = vadd.f32 %v611, 1.0
          %v616 = vadd.f32 %v612, 1.0
          %v617 = vadd.f32 %v613, 1.0
          %v618 = vadd.f32 %v614, 1.0
          %v619 = vmul.f32 %v607, %v615
          %v620 = vmul.f32 %v608, %v616
          %v621 = vmul.f32 %v609, %v617
          %v622 = vmul.f32 %v610, %v618
          %s623 = sld [smem:[#allocation3]]
          %v624 = vstv %s623
          %v625 = vsub.f32 %v603, %v624
          %v626 = vsub.f32 %v604, %v624
          %v627 = vsub.f32 %v605, %v624
          %v628 = vsub.f32 %v606, %v624
          %v629 = vmax.f32 %v625, 0.0
          %v630 = vmax.f32 %v626, 0.0
          %v631 = vmax.f32 %v627, 0.0
          %v632 = vmax.f32 %v628, 0.0
          %v633 = vmul.f32 %v629, %v629
          %v634 = vmul.f32 %v630, %v630
          %v635 = vmul.f32 %v631, %v631
          %v636 = vmul.f32 %v632, %v632
          %v637 = vmul.f32 %v633, %v629
          %v638 = vmul.f32 %v634, %v630
          %v639 = vmul.f32 %v635, %v631
          %v640 = vmul.f32 %v636, %v632
          %641 = vset.pattern.permute.xlu0 0
          %642 = vperm.xlu0 %641, %v593
          %v643 = vpop.permute.xlu0 %642
          %v645 = vmul.f32 %v637, %v643
          %v646 = vmul.f32 %v638, %v643
          %v647 = vmul.f32 %v639, %v643
          %v648 = vmul.f32 %v640, %v643
          %v649 = vadd.f32 %v645, 0.0
          %v650 = vadd.f32 %v646, 0.0
          %v651 = vadd.f32 %v647, 0.0
          %v652 = vadd.f32 %v648, 0.0
          %s653 = sld [smem:[#allocation3 + $0x1]]
          %v654 = vstv %s653
          %v655 = vsub.f32 %v603, %v654
          %v656 = vsub.f32 %v604, %v654
          %v657 = vsub.f32 %v605, %v654
          %v658 = vsub.f32 %v606, %v654
          %v659 = vmax.f32 %v655, 0.0
          %v660 = vmax.f32 %v656, 0.0
          %v661 = vmax.f32 %v657, 0.0
          %v662 = vmax.f32 %v658, 0.0
          %v663 = vmul.f32 %v659, %v659
          %v664 = vmul.f32 %v660, %v660
          %v665 = vmul.f32 %v661, %v661
          %v666 = vmul.f32 %v662, %v662
          %v667 = vmul.f32 %v663, %v659
          %v668 = vmul.f32 %v664, %v660
          %v669 = vmul.f32 %v665, %v661
          %v670 = vmul.f32 %v666, %v662
          %671 = vset.pattern.permute.xlu0 1
          %672 = vperm.xlu0 %671, %v593
          %v673 = vpop.permute.xlu0 %672
          %v675 = vmul.f32 %v667, %v673
          %v676 = vmul.f32 %v668, %v673
          %v677 = vmul.f32 %v669, %v673
          %v678 = vmul.f32 %v670, %v673
          %v679 = vadd.f32 %v649, %v675
          %v680 = vadd.f32 %v650, %v676
          %v681 = vadd.f32 %v651, %v677
          %v682 = vadd.f32 %v652, %v678
          %s683 = sld [smem:[#allocation3 + $0x2]]
          %v684 = vstv %s683
          %v685 = vsub.f32 %v603, %v684
          %v686 = vsub.f32 %v604, %v684
          %v687 = vsub.f32 %v605, %v684
          %v688 = vsub.f32 %v606, %v684
          %v689 = vmax.f32 %v685, 0.0
          %v690 = vmax.f32 %v686, 0.0
          %v691 = vmax.f32 %v687, 0.0
          %v692 = vmax.f32 %v688, 0.0
          %v693 = vmul.f32 %v689, %v689
          %v694 = vmul.f32 %v690, %v690
          %v695 = vmul.f32 %v691, %v691
          %v696 = vmul.f32 %v692, %v692
          %v697 = vmul.f32 %v693, %v689
          %v698 = vmul.f32 %v694, %v690
          %v699 = vmul.f32 %v695, %v691
          %v700 = vmul.f32 %v696, %v692
          %701 = vset.pattern.permute.xlu0 2
          %702 = vperm.xlu0 %701, %v593
          %v703 = vpop.permute.xlu0 %702
          %v705 = vmul.f32 %v697, %v703
          %v706 = vmul.f32 %v698, %v703
          %v707 = vmul.f32 %v699, %v703
          %v708 = vmul.f32 %v700, %v703
          %v709 = vadd.f32 %v679, %v705
          %v710 = vadd.f32 %v680, %v706
          %v711 = vadd.f32 %v681, %v707
          %v712 = vadd.f32 %v682, %v708
          %s713 = sld [smem:[#allocation3 + $0x3]]
          %v714 = vstv %s713
          %v715 = vsub.f32 %v603, %v714
          %v716 = vsub.f32 %v604, %v714
          %v717 = vsub.f32 %v605, %v714
          %v718 = vsub.f32 %v606, %v714
          %v719 = vmax.f32 %v715, 0.0
          %v720 = vmax.f32 %v716, 0.0
          %v721 = vmax.f32 %v717, 0.0
          %v722 = vmax.f32 %v718, 0.0
          %v723 = vmul.f32 %v719, %v719
          %v724 = vmul.f32 %v720, %v720
          %v725 = vmul.f32 %v721, %v721
          %v726 = vmul.f32 %v722, %v722
          %v727 = vmul.f32 %v723, %v719
          %v728 = vmul.f32 %v724, %v720
          %v729 = vmul.f32 %v725, %v721
          %v730 = vmul.f32 %v726, %v722
          %731 = vset.pattern.permute.xlu0 3
          %732 = vperm.xlu0 %731, %v593
          %v733 = vpop.permute.xlu0 %732
          %v735 = vmul.f32 %v727, %v733
          %v736 = vmul.f32 %v728, %v733
          %v737 = vmul.f32 %v729, %v733
          %v738 = vmul.f32 %v730, %v733
          %v739 = vadd.f32 %v709, %v735
          %v740 = vadd.f32 %v710, %v736
          %v741 = vadd.f32 %v711, %v737
          %v742 = vadd.f32 %v712, %v738
          %s743 = sld [smem:[#allocation3 + $0x4]]
          %v744 = vstv %s743
          %v745 = vsub.f32 %v603, %v744
          %v746 = vsub.f32 %v604, %v744
          %v747 = vsub.f32 %v605, %v744
          %v748 = vsub.f32 %v606, %v744
          %v749 = vmax.f32 %v745, 0.0
          %v750 = vmax.f32 %v746, 0.0
          %v751 = vmax.f32 %v747, 0.0
          %v752 = vmax.f32 %v748, 0.0
          %v753 = vmul.f32 %v749, %v749
          %v754 = vmul.f32 %v750, %v750
          %v755 = vmul.f32 %v751, %v751
          %v756 = vmul.f32 %v752, %v752
          %v757 = vmul.f32 %v753, %v749
          %v758 = vmul.f32 %v754, %v750
          %v759 = vmul.f32 %v755, %v751
          %v760 = vmul.f32 %v756, %v752
          %761 = vset.pattern.permute.xlu0 4
          %762 = vperm.xlu0 %761, %v593
          %v763 = vpop.permute.xlu0 %762
          %v765 = vmul.f32 %v757, %v763
          %v766 = vmul.f32 %v758, %v763
          %v767 = vmul.f32 %v759, %v763
          %v768 = vmul.f32 %v760, %v763
          %v769 = vadd.f32 %v739, %v765
          %v770 = vadd.f32 %v740, %v766
          %v771 = vadd.f32 %v741, %v767
          %v772 = vadd.f32 %v742, %v768
          %s773 = sld [smem:[#allocation3 + $0x5]]
          %v774 = vstv %s773
          %v775 = vsub.f32 %v603, %v774
          %v776 = vsub.f32 %v604, %v774
          %v777 = vsub.f32 %v605, %v774
          %v778 = vsub.f32 %v606, %v774
          %v779 = vmax.f32 %v775, 0.0
          %v780 = vmax.f32 %v776, 0.0
          %v781 = vmax.f32 %v777, 0.0
          %v782 = vmax.f32 %v778, 0.0
          %v783 = vmul.f32 %v779, %v779
          %v784 = vmul.f32 %v780, %v780
          %v785 = vmul.f32 %v781, %v781
          %v786 = vmul.f32 %v782, %v782
          %v787 = vmul.f32 %v783, %v779
          %v788 = vmul.f32 %v784, %v780
          %v789 = vmul.f32 %v785, %v781
          %v790 = vmul.f32 %v786, %v782
          %791 = vset.pattern.permute.xlu0 5
          %792 = vperm.xlu0 %791, %v593
          %v793 = vpop.permute.xlu0 %792
          %v795 = vmul.f32 %v787, %v793
          %v796 = vmul.f32 %v788, %v793
          %v797 = vmul.f32 %v789, %v793
          %v798 = vmul.f32 %v790, %v793
          %v799 = vadd.f32 %v769, %v795
          %v800 = vadd.f32 %v770, %v796
          %v801 = vadd.f32 %v771, %v797
          %v802 = vadd.f32 %v772, %v798
          %s803 = sld [smem:[#allocation3 + $0x6]]
          %v804 = vstv %s803
          %v805 = vsub.f32 %v603, %v804
          %v806 = vsub.f32 %v604, %v804
          %v807 = vsub.f32 %v605, %v804
          %v808 = vsub.f32 %v606, %v804
          %v809 = vmax.f32 %v805, 0.0
          %v810 = vmax.f32 %v806, 0.0
          %v811 = vmax.f32 %v807, 0.0
          %v812 = vmax.f32 %v808, 0.0
          %v813 = vmul.f32 %v809, %v809
          %v814 = vmul.f32 %v810, %v810
          %v815 = vmul.f32 %v811, %v811
          %v816 = vmul.f32 %v812, %v812
          %v817 = vmul.f32 %v813, %v809
          %v818 = vmul.f32 %v814, %v810
          %v819 = vmul.f32 %v815, %v811
          %v820 = vmul.f32 %v816, %v812
          %821 = vset.pattern.permute.xlu0 6
          %822 = vperm.xlu0 %821, %v593
          %v823 = vpop.permute.xlu0 %822
          %v825 = vmul.f32 %v817, %v823
          %v826 = vmul.f32 %v818, %v823
          %v827 = vmul.f32 %v819, %v823
          %v828 = vmul.f32 %v820, %v823
          %v829 = vadd.f32 %v799, %v825
          %v830 = vadd.f32 %v800, %v826
          %v831 = vadd.f32 %v801, %v827
          %v832 = vadd.f32 %v802, %v828
          %s833 = sld [smem:[#allocation3 + $0x7]]
          %v834 = vstv %s833
          %v835 = vsub.f32 %v603, %v834
          %v836 = vsub.f32 %v604, %v834
          %v837 = vsub.f32 %v605, %v834
          %v838 = vsub.f32 %v606, %v834
          %v839 = vmax.f32 %v835, 0.0
          %v840 = vmax.f32 %v836, 0.0
          %v841 = vmax.f32 %v837, 0.0
          %v842 = vmax.f32 %v838, 0.0
          %v843 = vmul.f32 %v839, %v839
          %v844 = vmul.f32 %v840, %v840
          %v845 = vmul.f32 %v841, %v841
          %v846 = vmul.f32 %v842, %v842
          %v847 = vmul.f32 %v843, %v839
          %v848 = vmul.f32 %v844, %v840
          %v849 = vmul.f32 %v845, %v841
          %v850 = vmul.f32 %v846, %v842
          %851 = vset.pattern.permute.xlu0 7
          %852 = vperm.xlu0 %851, %v593
          %v853 = vpop.permute.xlu0 %852
          %v855 = vmul.f32 %v847, %v853
          %v856 = vmul.f32 %v848, %v853
          %v857 = vmul.f32 %v849, %v853
          %v858 = vmul.f32 %v850, %v853
          %v859 = vadd.f32 %v829, %v855
          %v860 = vadd.f32 %v830, %v856
          %v861 = vadd.f32 %v831, %v857
          %v862 = vadd.f32 %v832, %v858
          %s863 = sld [smem:[#allocation3 + $0x8]]
          %v864 = vstv %s863
          %v865 = vsub.f32 %v603, %v864
          %v866 = vsub.f32 %v604, %v864
          %v867 = vsub.f32 %v605, %v864
          %v868 = vsub.f32 %v606, %v864
          %v869 = vmax.f32 %v865, 0.0
          %v870 = vmax.f32 %v866, 0.0
          %v871 = vmax.f32 %v867, 0.0
          %v872 = vmax.f32 %v868, 0.0
          %v873 = vmul.f32 %v869, %v869
          %v874 = vmul.f32 %v870, %v870
          %v875 = vmul.f32 %v871, %v871
          %v876 = vmul.f32 %v872, %v872
          %v877 = vmul.f32 %v873, %v869
          %v878 = vmul.f32 %v874, %v870
          %v879 = vmul.f32 %v875, %v871
          %v880 = vmul.f32 %v876, %v872
          %881 = vset.pattern.permute.xlu0 8
          %882 = vperm.xlu0 %881, %v593
          %v883 = vpop.permute.xlu0 %882
          %v885 = vmul.f32 %v877, %v883
          %v886 = vmul.f32 %v878, %v883
          %v887 = vmul.f32 %v879, %v883
          %v888 = vmul.f32 %v880, %v883
          %v889 = vadd.f32 %v859, %v885
          %v890 = vadd.f32 %v860, %v886
          %v891 = vadd.f32 %v861, %v887
          %v892 = vadd.f32 %v862, %v888
          %s893 = sld [smem:[#allocation3 + $0x9]]
          %v894 = vstv %s893
          %v895 = vsub.f32 %v603, %v894
          %v896 = vsub.f32 %v604, %v894
          %v897 = vsub.f32 %v605, %v894
          %v898 = vsub.f32 %v606, %v894
          %v899 = vmax.f32 %v895, 0.0
          %v900 = vmax.f32 %v896, 0.0
          %v901 = vmax.f32 %v897, 0.0
          %v902 = vmax.f32 %v898, 0.0
          %v903 = vmul.f32 %v899, %v899
          %v904 = vmul.f32 %v900, %v900
          %v905 = vmul.f32 %v901, %v901
          %v906 = vmul.f32 %v902, %v902
          %v907 = vmul.f32 %v903, %v899
          %v908 = vmul.f32 %v904, %v900
          %v909 = vmul.f32 %v905, %v901
          %v910 = vmul.f32 %v906, %v902
          %911 = vset.pattern.permute.xlu0 9
          %912 = vperm.xlu0 %911, %v593
          %v913 = vpop.permute.xlu0 %912
          %v915 = vmul.f32 %v907, %v913
          %v916 = vmul.f32 %v908, %v913
          %v917 = vmul.f32 %v909, %v913
          %v918 = vmul.f32 %v910, %v913
          %v919 = vadd.f32 %v889, %v915
          %v920 = vadd.f32 %v890, %v916
          %v921 = vadd.f32 %v891, %v917
          %v922 = vadd.f32 %v892, %v918
          %923 = vset.pattern.permute.xlu0 11
          %924 = vperm.xlu0 %923, %v593
          %v925 = vpop.permute.xlu0 %924
          %v927 = vmul.f32 %v925, %v619
          %v928 = vmul.f32 %v925, %v620
          %v929 = vmul.f32 %v925, %v621
          %v930 = vmul.f32 %v925, %v622
          %v931 = vadd.f32 %v919, %v927
          %v932 = vadd.f32 %v920, %v928
          %v933 = vadd.f32 %v921, %v929
          %v934 = vadd.f32 %v922, %v930
          %935 = vst [vmem:[%s292] sm:$0xff] %v931
          %936 = vst [vmem:[%s292 + $0x8] sm:$0xff] %v932
          %937 = vst [vmem:[%s292 + $0x10] sm:$0xff] %v933
          %938 = vst [vmem:[%s292 + $0x18] sm:$0xff] %v934
        $region48: #{spline_conv3d_forward.1} parent=35 // pred_fallthru
          _
        %s939 = smul.u32 4, %s22
        %p940 = scmp.lt.s32.totalorder %s21, 1
        %s941 = scalar_select %p940, %s21, 1
        %p942 = scmp.lt.s32.totalorder %s939, 3
        %s943 = scalar_select %p942, %s939, 3
        %s944 = smul.addr %s941, 4
        %s945 = sadd.s32 %s943, %s944
        %s946 = smul.addr %s945, 8
        %s947 = scalar_lea.vmem %s4, %s946
        // Predicated region
        $region49: #{spline_conv3d_forward.1} parent=35 // pred_check
          %p948 = pneg %p153
        $region50: #{spline_conv3d_forward.1} parent=35 // pred_check_branch
          %950 = sbr.rel (%p948) target = $region52
        $region51: #{spline_conv3d_forward.1} parent=35 // pred_region
          %s951 = smul.u32 4, %s22
        $region52: #{spline_conv3d_forward.1} parent=35 // pred_fallthru
          _
      $region36: #{spline_conv3d_forward.1} parent=5 // pred_fallthru
        _
      %p952 = scmp.le.s32.totalorder 2, %s11
      // Predicated region
      $region53: #{spline_conv3d_forward.1} parent=5 // pred_check
        %p953 = pneg %p952
      $region54: #{spline_conv3d_forward.1} parent=5 // pred_check_branch
        %955 = sbr.rel (%p953) target = $region56
      $region55: #{spline_conv3d_forward.1} parent=5 // pred_region
        %s956 = ssub.s32 %s11, 2
        // Predicated region
        $region57: #{spline_conv3d_forward.1} parent=55 // pred_check
          %p957 = pneg %p159
        $region58: #{spline_conv3d_forward.1} parent=55 // pred_check_branch
          %959 = sbr.rel (%p957) target = $region60
        $region59: #{spline_conv3d_forward.1} parent=55 // pred_region
          %s960 = smul.u32 4, %s25
          %p961 = scmp.lt.s32.totalorder %s24, 1
          %s962 = scalar_select %p961, %s24, 1
          %p963 = scmp.lt.s32.totalorder %s960, 3
          %s964 = scalar_select %p963, %s960, 3
          %s965 = smul.addr %s962, 4
          %s966 = sadd.s32 %s964, %s965
          %s967 = smul.addr %s966, 8
          %s968 = scalar_lea.vmem %s4, %s967
        $region60: #{spline_conv3d_forward.1} parent=55 // pred_fallthru
          _
      $region56: #{spline_conv3d_forward.1} parent=5 // pred_fallthru
        _
    $region6: #{spline_conv3d_forward.1} parent=1 // loop_footer
      %s15 = sadd.s32 1, %s11
    $region7: #{spline_conv3d_forward.1} parent=1 // loop_footer_branch
      %10 = sbr.rel target = $region3
    $region8: #{spline_conv3d_forward.1} parent=1 // loop_exit
      _
    %969 = vsyncpa [#allocation4], 1
    %s970 = scalar_lea.sflag [#allocation4], 1
    %971 = vsyncpa %s970, 1

</llo_original>
